<compile_context>
chip_gen: v5e
topology: v5e:2x2
jax: 0.10.0
libtpu: 0.0.40
codegen_flags: <defaults>
</compile_context>

<pallas_src>
import functools

import jax
import jax.numpy as jnp
from jax import lax
from jax.experimental import pallas as pl
from jax.experimental.pallas import tpu as pltpu


_UNROLL_LIMIT = 8  # fully unroll the stacked-layer loop up to this depth


def _dnn_kernel(x_ref, w0_ref, b0_ref, wr_ref, br_ref, o_ref, *, use_res, mxu_dtype):
    """Fused MLP over one batch tile: layer 0 + (hidden_num-1) stacked layers, all tanh.

    Weights arrive already cast to `mxu_dtype` (done once in HBM by the
    wrapper); only the per-step activation is cast here. Accumulation is always
    f32; bias add and tanh are always f32.
    """

    def matmul(lhs, w):
        if mxu_dtype is not None and lhs.dtype != mxu_dtype:
            lhs = lhs.astype(mxu_dtype)
        return jnp.dot(lhs, w, preferred_element_type=jnp.float32)

    # Layer 0.
    h = jnp.tanh(matmul(x_ref[...], w0_ref[...]) + b0_ref[...])
    first = h  # torch.clone(fc) at i == 0

    n_rest = wr_ref.shape[0]  # hidden_num - 1 (static)

    def layer(i, h):
        fc = jnp.tanh(matmul(h, wr_ref[i]) + br_ref[i])
        if use_res:
            fc = fc + first
        return fc

    if n_rest <= _UNROLL_LIMIT:
        # Static full unroll: gives the scheduler cross-layer visibility
        # (tanh on EUP overlaps the next layer's MXU push).
        for i in range(n_rest):
            h = layer(i, h)
    else:
        h = lax.fori_loop(0, n_rest, layer, h)

    o_ref[...] = h.astype(o_ref.dtype)


def _pick_block_b(B):
    """Largest 8-aligned batch tile <= 512 that divides B.

    No grid>=2 forcing: per-step overhead dominates at these shapes, weights
    are resident, and the x/out tile DMA is tiny, so bigger tiles win."""
    for cand in (512, 256, 128, 64, 32, 16, 8):
        if cand <= B and B % cand == 0:
            return cand
    return B  # small / odd batch: single grid step


def _physical_vmem_bytes():
    """Generation-aware physical VMEM; conservative 64 MiB fallback (v7x)."""
    try:
        info = pltpu.get_tpu_info()
        for attr in ("vmem_capacity_bytes", "vmem_size_bytes"):
            v = getattr(info, attr, None)
            if v:
                return int(v)
    except Exception:
        pass
    return 64 << 20


def dnn_forward(x, w0, b0, w_rest, b_rest, *, use_res=False, block_b=None,
                mxu_dtype=jnp.bfloat16, single_buffer_weights=True):
    """x: [B, input_dim]; w0: [input_dim, H]; b0: [1, H];
    w_rest: [hidden_num-1, H, H]; b_rest: [hidden_num-1, 1, H].

    mxu_dtype: dtype of MXU matmul operands (default bf16; accumulation, bias
    add and tanh remain f32). Pass mxu_dtype=None for an all-f32 path with
    tight numerics."""
    B, D = x.shape
    H = w0.shape[1]
    L1 = w_rest.shape[0]
    assert L1 >= 1, "fused kernel expects hidden_num >= 2"

    tb = _pick_block_b(B) if block_b is None else block_b
    assert B % tb == 0, f"batch {B} must be divisible by block_b {tb}"

    # Pre-cast weights once in HBM (halves weight DMA + resident VMEM, removes
    # per-step VPU packing). Biases stay f32 (f32 bias/tanh path).
    if mxu_dtype is not None:
        w0 = w0.astype(mxu_dtype)
        w_rest = w_rest.astype(mxu_dtype)

    kernel = functools.partial(_dnn_kernel, use_res=use_res, mxu_dtype=mxu_dtype)

    # Weights / biases have constant index_maps, so double buffering buys nothing;
    # single-buffer them to halve their VMEM footprint.
    w_mode = pl.Buffered(1) if single_buffer_weights else None
    w_bufs = 1 if single_buffer_weights else 2

    # Scoped-VMEM budget: dtype-aware footprint, generation-aware cap.
    w_isz = jnp.dtype(mxu_dtype).itemsize if mxu_dtype is not None else 4
    a_isz = x.dtype.itemsize
    weight_bytes = w_bufs * ((D * H + L1 * H * H) * w_isz + (H + L1 * H) * 4)
    act_bytes = 2 * (tb * D + tb * H) * a_isz          # double-buffered x / out tiles
    live_bytes = tb * H * (3 * 4 + (w_isz if mxu_dtype is not None else 0))
    phys = _physical_vmem_bytes()
    cap = max(phys - (16 << 20), 16 << 20)             # headroom for compiler scratch
    vmem_limit = int(min(max(weight_bytes + act_bytes + live_bytes + (4 << 20),
                             16 << 20), cap))

    hidden_num = L1 + 1
    flops = 2 * B * (D * H + L1 * H * H) + B * H * hidden_num   # matmuls + bias adds
    bytes_accessed = (x.size * a_isz + B * H * a_isz
                      + (D * H + L1 * H * H) * w_isz + (H + L1 * H) * 4)

    return pl.pallas_call(
        kernel,
        out_shape=jax.ShapeDtypeStruct((B, H), x.dtype),
        grid_spec=pltpu.PrefetchScalarGridSpec(
            num_scalar_prefetch=0,
            grid=(B // tb,),
            in_specs=[
                pl.BlockSpec((tb, D), lambda i: (i, 0)),
                pl.BlockSpec((D, H), lambda i: (0, 0), pipeline_mode=w_mode),
                pl.BlockSpec((1, H), lambda i: (0, 0), pipeline_mode=w_mode),
                pl.BlockSpec((L1, H, H), lambda i: (0, 0, 0), pipeline_mode=w_mode),
                pl.BlockSpec((L1, 1, H), lambda i: (0, 0, 0), pipeline_mode=w_mode),
            ],
            out_specs=pl.BlockSpec((tb, H), lambda i: (i, 0)),
        ),
        compiler_params=pltpu.CompilerParams(
            dimension_semantics=("parallel",),
            vmem_limit_bytes=vmem_limit,
        ),
        cost_estimate=pl.CostEstimate(
            flops=flops,
            transcendentals=B * H * hidden_num,       # tanh per layer
            bytes_accessed=bytes_accessed,
        ),
    )(x, w0, b0, w_rest, b_rest)


def _xavier_uniform(key, fan_in, fan_out, gain):
    limit = gain * jnp.sqrt(6.0 / (fan_in + fan_out))
    return jax.random.uniform(
        key, (fan_in, fan_out), minval=-limit, maxval=limit, dtype=jnp.float32
    )


def init_dnn_params(key, input_dim, hidden_dim, hidden_num):
    """Mirror __init__: xavier_uniform with tanh gain (5/3) for weights; PyTorch
    default uniform(-1/sqrt(fan_in), 1/sqrt(fan_in)) for biases."""
    gain = 5.0 / 3.0  # nn.init.calculate_gain('tanh')
    layer_dims = [input_dim] + [hidden_dim] * hidden_num
    keys = jax.random.split(key, 2 * hidden_num)
    ws, bs = [], []
    for i in range(hidden_num):
        fi, fo = layer_dims[i], layer_dims[i + 1]
        ws.append(_xavier_uniform(keys[2 * i], fi, fo, gain))
        bound = 1.0 / jnp.sqrt(fi)
        bs.append(jax.random.uniform(keys[2 * i + 1], (1, fo),
                                     minval=-bound, maxval=bound, dtype=jnp.float32))
    w0, b0 = ws[0], bs[0]
    w_rest = jnp.stack(ws[1:], axis=0)   # [hidden_num-1, H, H]
    b_rest = jnp.stack(bs[1:], axis=0)   # [hidden_num-1, 1, H]
    return w0, b0, w_rest, b_rest


def dnn_reference(x, w0, b0, w_rest, b_rest, use_res=False):
    h = jnp.tanh(x @ w0 + b0)
    first = h
    for i in range(w_rest.shape[0]):
        fc = jnp.tanh(h @ w_rest[i] + b_rest[i])
        h = fc + first if use_res else fc
    return h


if __name__ == "__main__":
    batch = 256          # single 256-row tile (grid=1) -> no per-step overhead
    input_dim = 128      # lane-dense
    hidden_dim = 128     # lane-dense (multiple of 128 -> unmasked vst)
    hidden_num = 3

    key = jax.random.PRNGKey(0)
    kx, kp = jax.random.split(key)
    x = jax.random.normal(kx, (batch, input_dim), dtype=jnp.float32)
    w0, b0, w_rest, b_rest = init_dnn_params(kp, input_dim, hidden_dim, hidden_num)

    # Default path: bf16 MXU operands (f32 accumulation) -- loose tolerance,
    # both residual settings.
    for use_res in (False, True):
        out = dnn_forward(x, w0, b0, w_rest, b_rest, use_res=use_res)
        out = jax.block_until_ready(out)
        ref = dnn_reference(x, w0, b0, w_rest, b_rest, use_res=use_res)
        assert out.shape == (batch, hidden_dim)
        assert jnp.max(jnp.abs(out - ref)) < 5e-2, \
            f"bf16-default path mismatch (use_res={use_res})"

    # Explicit all-f32 path -- tight tolerance.
    for use_res in (False, True):
        out_f32 = jax.block_until_ready(
            dnn_forward(x, w0, b0, w_rest, b_rest, use_res=use_res,
                        mxu_dtype=None))
        ref = dnn_reference(x, w0, b0, w_rest, b_rest, use_res=use_res)
        assert jnp.allclose(out_f32, ref, atol=1e-4, rtol=1e-4), \
            f"f32 path mismatch (use_res={use_res})"

    print("KERNEL_OK")
</pallas_src>

<mosaic_0001>
module attributes {stable_mosaic.version = 11 : i64} {
  func.func @_dnn_kernel(%arg0: i32, %arg1: memref<256x128xf32, #tpu.memory_space<vmem>>, %arg2: memref<128x128xbf16, #tpu.memory_space<vmem>>, %arg3: memref<1x128xf32, #tpu.memory_space<vmem>>, %arg4: memref<2x128x128xbf16, #tpu.memory_space<vmem>>, %arg5: memref<2x1x128xf32, #tpu.memory_space<vmem>>, %arg6: memref<256x128xf32, #tpu.memory_space<vmem>>) attributes {dimension_semantics = [#tpu.dimension_semantics<parallel>], iteration_bounds = array<i64: 1>, scalar_prefetch = 0 : i64, scratch_operands = 0 : i64, tpu.core_type = #tpu.core_type<tc>, window_params = [{transform_indices = @transform_0, window_bounds = array<i64: 256, 128>}, {pipeline_mode = #tpu.pipeline_mode<synchronous>, transform_indices = @transform_1, window_bounds = array<i64: 128, 128>}, {pipeline_mode = #tpu.pipeline_mode<synchronous>, transform_indices = @transform_2, window_bounds = array<i64: 1, 128>}, {pipeline_mode = #tpu.pipeline_mode<synchronous>, transform_indices = @transform_3, window_bounds = array<i64: 2, 128, 128>}, {pipeline_mode = #tpu.pipeline_mode<synchronous>, transform_indices = @transform_4, window_bounds = array<i64: 2, 1, 128>}, {transform_indices = @transform_5, window_bounds = array<i64: 256, 128>}]} {
    %c0 = arith.constant 0 : index
    %c0_0 = arith.constant 0 : index
    %0 = vector.load %arg1[%c0, %c0_0] : memref<256x128xf32, #tpu.memory_space<vmem>>, vector<256x128xf32>
    %c0_1 = arith.constant 0 : index
    %c0_2 = arith.constant 0 : index
    %1 = vector.load %arg2[%c0_1, %c0_2] : memref<128x128xbf16, #tpu.memory_space<vmem>>, vector<128x128xbf16>
    %2 = arith.truncf %0 : vector<256x128xf32> to vector<256x128xbf16>
    %cst = arith.constant dense<0.000000e+00> : vector<256x128xf32>
    %3 = tpu.matmul %2, %1, %cst {dimension_numbers = #tpu.dot_dimension_numbers<[1], [0], [0], [1], [0, 0, 1, 1], [], []>} : vector<256x128xbf16>, vector<128x128xbf16>, vector<256x128xf32> -> vector<256x128xf32>
    %c0_3 = arith.constant 0 : index
    %c0_4 = arith.constant 0 : index
    %4 = vector.load %arg3[%c0_3, %c0_4] : memref<1x128xf32, #tpu.memory_space<vmem>>, vector<1x128xf32>
    %5 = vector.broadcast %4 : vector<1x128xf32> to vector<256x128xf32>
    %6 = arith.addf %3, %5 : vector<256x128xf32>
    %7 = math.tanh %6 : vector<256x128xf32>
    %c0_5 = arith.constant 0 : index
    %c0_6 = arith.constant 0 : index
    %c0_7 = arith.constant 0 : index
    %8 = vector.load %arg4[%c0_5, %c0_6, %c0_7] : memref<2x128x128xbf16, #tpu.memory_space<vmem>>, vector<1x128x128xbf16>
    %9 = vector.shape_cast %8 : vector<1x128x128xbf16> to vector<128x128xbf16>
    %10 = arith.truncf %7 : vector<256x128xf32> to vector<256x128xbf16>
    %cst_8 = arith.constant dense<0.000000e+00> : vector<256x128xf32>
    %11 = tpu.matmul %10, %9, %cst_8 {dimension_numbers = #tpu.dot_dimension_numbers<[1], [0], [0], [1], [0, 0, 1, 1], [], []>} : vector<256x128xbf16>, vector<128x128xbf16>, vector<256x128xf32> -> vector<256x128xf32>
    %c0_9 = arith.constant 0 : index
    %c0_10 = arith.constant 0 : index
    %c0_11 = arith.constant 0 : index
    %12 = vector.load %arg5[%c0_9, %c0_10, %c0_11] : memref<2x1x128xf32, #tpu.memory_space<vmem>>, vector<1x1x128xf32>
    %13 = vector.shape_cast %12 : vector<1x1x128xf32> to vector<1x128xf32>
    %14 = vector.broadcast %13 : vector<1x128xf32> to vector<256x128xf32>
    %15 = arith.addf %11, %14 : vector<256x128xf32>
    %16 = math.tanh %15 : vector<256x128xf32>
    %c1 = arith.constant 1 : index
    %c0_12 = arith.constant 0 : index
    %c0_13 = arith.constant 0 : index
    %17 = vector.load %arg4[%c1, %c0_12, %c0_13] : memref<2x128x128xbf16, #tpu.memory_space<vmem>>, vector<1x128x128xbf16>
    %18 = vector.shape_cast %17 : vector<1x128x128xbf16> to vector<128x128xbf16>
    %19 = arith.truncf %16 : vector<256x128xf32> to vector<256x128xbf16>
    %cst_14 = arith.constant dense<0.000000e+00> : vector<256x128xf32>
    %20 = tpu.matmul %19, %18, %cst_14 {dimension_numbers = #tpu.dot_dimension_numbers<[1], [0], [0], [1], [0, 0, 1, 1], [], []>} : vector<256x128xbf16>, vector<128x128xbf16>, vector<256x128xf32> -> vector<256x128xf32>
    %c1_15 = arith.constant 1 : index
    %c0_16 = arith.constant 0 : index
    %c0_17 = arith.constant 0 : index
    %21 = vector.load %arg5[%c1_15, %c0_16, %c0_17] : memref<2x1x128xf32, #tpu.memory_space<vmem>>, vector<1x1x128xf32>
    %22 = vector.shape_cast %21 : vector<1x1x128xf32> to vector<1x128xf32>
    %23 = vector.broadcast %22 : vector<1x128xf32> to vector<256x128xf32>
    %24 = arith.addf %20, %23 : vector<256x128xf32>
    %25 = math.tanh %24 : vector<256x128xf32>
    %c0_18 = arith.constant 0 : index
    %c0_19 = arith.constant 0 : index
    %26 = vector.load %arg6[%c0_18, %c0_19] : memref<256x128xf32, #tpu.memory_space<vmem>>, vector<256x128xf32>
    tpu.vector_store %arg6[%c0_18, %c0_19], %25 {strides = array<i32>} : memref<256x128xf32, #tpu.memory_space<vmem>>, vector<256x128xf32>,
    return
  }
  func.func @transform_0(%arg0: i32) -> (i32, i32) {
    %c0_i32 = arith.constant 0 : i32
    %c0_i32_0 = arith.constant 0 : i32
    return %arg0, %c0_i32 : i32, i32
  }
  func.func @transform_1(%arg0: i32) -> (i32, i32) {
    %c0_i32 = arith.constant 0 : i32
    %c0_i32_0 = arith.constant 0 : i32
    %c0_i32_1 = arith.constant 0 : i32
    return %c0_i32, %c0_i32_0 : i32, i32
  }
  func.func @transform_2(%arg0: i32) -> (i32, i32) {
    %c0_i32 = arith.constant 0 : i32
    %c0_i32_0 = arith.constant 0 : i32
    %c0_i32_1 = arith.constant 0 : i32
    return %c0_i32, %c0_i32_0 : i32, i32
  }
  func.func @transform_3(%arg0: i32) -> (i32, i32, i32) {
    %c0_i32 = arith.constant 0 : i32
    %c0_i32_0 = arith.constant 0 : i32
    %c0_i32_1 = arith.constant 0 : i32
    %c0_i32_2 = arith.constant 0 : i32
    return %c0_i32, %c0_i32_0, %c0_i32_1 : i32, i32, i32
  }
  func.func @transform_4(%arg0: i32) -> (i32, i32, i32) {
    %c0_i32 = arith.constant 0 : i32
    %c0_i32_0 = arith.constant 0 : i32
    %c0_i32_1 = arith.constant 0 : i32
    %c0_i32_2 = arith.constant 0 : i32
    return %c0_i32, %c0_i32_0, %c0_i32_1 : i32, i32, i32
  }
  func.func @transform_5(%arg0: i32) -> (i32, i32) {
    %c0_i32 = arith.constant 0 : i32
    %c0_i32_0 = arith.constant 0 : i32
    return %arg0, %c0_i32 : i32, i32
  }
}

</mosaic_0001>

<llo_original>
// kernel: tpu_custom_call.1
$region0: #{tpu_custom_call.1}
  #allocation0 [shape = 'u32[]', space=smem, size = 0x4, offset = 0x4, fixed_abs, tag = 'smem constant byte address 0x4 - core index']
  #allocation1 [shape = 'u32[72,128]{1,0:T(1,128)}', space=vmem, size = 0x9000, scoped, tag = 'internal scratch']
  %s0 = inlined_call_operand.hbm [shape: f32[256,128], index: 0, kind: input, shape index: {}]
  %s1 = inlined_call_operand.hbm [shape: bf16[128,128], index: 1, kind: input, shape index: {}]
  %s2 = inlined_call_operand.vmem [shape: f32[1,128], index: 2, kind: input, shape index: {}]
  %s3 = inlined_call_operand.hbm [shape: bf16[2,128,128], index: 3, kind: input, shape index: {}]
  %s4 = inlined_call_operand.vmem [shape: f32[2,1,128], index: 4, kind: input, shape index: {}]
  %s5 = inlined_call_operand.hbm [shape: f32[256,128], index: 5, kind: output, shape index: {}]
  %s6 = sld [smem:[#allocation0]]
  $region42: #{tpu_custom_call.1} parent=0
    _
  %s8 = ssub.s32 1, %s6
  %s9 = scalar_select 0, %s8, %s6
  $region1: #{tpu_custom_call.1} parent=0
    #allocation2 [shape = 'u8[131072]{0}', space=vmem, size = 0x20000, scoped, tag = 'input window, operand 0, single buffered']
    #allocation3 [shape = 's32[1]{0}', space=sflag, size = 0x4, scoped, tag = 'scoped memory for tpu_custom_call.1']
    #allocation4 [shape = 's32[1]{0}', space=sflag, size = 0x4, scoped, tag = 'scoped memory for tpu_custom_call.1']
    #allocation5 [shape = 'u8[32768]{0}', space=vmem, size = 0x8000, scoped, tag = 'input window, operand 1, single buffered']
    #allocation6 [shape = 's32[1]{0}', space=sflag, size = 0x4, scoped, tag = 'scoped memory for tpu_custom_call.1']
    #allocation7 [shape = 'u8[65536]{0}', space=vmem, size = 0x10000, scoped, tag = 'input window, operand 3, single buffered']
    #allocation8 [shape = 'u8[131072]{0}', space=vmem, size = 0x20000, scoped, tag = 'output window, operand 0, single buffered']
    %10 = vsyncpa [#allocation3], 0
    %11 = vsyncpa [#allocation6], 0
    %12 = vsyncpa [#allocation4], 0
    // Predicated region
    $region2: #{tpu_custom_call.1} parent=1 // pred_check
      _
    $region3: #{tpu_custom_call.1} parent=1 // pred_check_branch
      %14 = sbr.rel (0) target = $region5
    $region4: #{tpu_custom_call.1} parent=1 // pred_region
      %16 = vsyncadd [#allocation3], 0
      %s17 = sshll.u32 %s0, 4
      %s18 = int_to_ptr.hbm [resolvable:$true] %s17
      %s19 = sshll.u32 [#allocation2], 4
      %s20 = int_to_ptr.vmem [resolvable:$true] %s19
      %25 = dma.hbm_to_vmem [thread:$0]  %s18, 4096, %s20, [#allocation3], 128, 128, 8
    $region5: #{tpu_custom_call.1} parent=1 // pred_fallthru
      _
    // Predicated region
    $region6: #{tpu_custom_call.1} parent=1 // pred_check
      _
    $region7: #{tpu_custom_call.1} parent=1 // pred_check_branch
      %27 = sbr.rel (0) target = $region9
    $region8: #{tpu_custom_call.1} parent=1 // pred_region
      %29 = vsyncadd [#allocation6], 0
      %s30 = sshll.u32 %s1, 4
      %s31 = int_to_ptr.hbm [resolvable:$true] %s30
      %s32 = sshll.u32 [#allocation5], 4
      %s33 = int_to_ptr.vmem [resolvable:$true] %s32
      %38 = dma.hbm_to_vmem [thread:$0]  %s31, 1024, %s33, [#allocation6], 64, 64, 4
    $region9: #{tpu_custom_call.1} parent=1 // pred_fallthru
      _
    // Predicated region
    $region10: #{tpu_custom_call.1} parent=1 // pred_check
      _
    $region11: #{tpu_custom_call.1} parent=1 // pred_check_branch
      %40 = sbr.rel (0) target = $region13
    $region12: #{tpu_custom_call.1} parent=1 // pred_region
      _
    $region13: #{tpu_custom_call.1} parent=1 // pred_fallthru
      _
    // Predicated region
    $region14: #{tpu_custom_call.1} parent=1 // pred_check
      _
    $region15: #{tpu_custom_call.1} parent=1 // pred_check_branch
      %42 = sbr.rel (0) target = $region17
    $region16: #{tpu_custom_call.1} parent=1 // pred_region
      %44 = vsyncadd [#allocation6], 0
      %s45 = sshll.u32 %s3, 4
      %s46 = int_to_ptr.hbm [resolvable:$true] %s45
      %s47 = sshll.u32 [#allocation7], 4
      %s48 = int_to_ptr.vmem [resolvable:$true] %s47
      %53 = dma.hbm_to_vmem [thread:$0]  %s46, 2048, %s48, [#allocation6], 64, 64, 4
    $region17: #{tpu_custom_call.1} parent=1 // pred_fallthru
      _
    // Predicated region
    $region18: #{tpu_custom_call.1} parent=1 // pred_check
      _
    $region19: #{tpu_custom_call.1} parent=1 // pred_check_branch
      %55 = sbr.rel (0) target = $region21
    $region20: #{tpu_custom_call.1} parent=1 // pred_region
      _
    $region21: #{tpu_custom_call.1} parent=1 // pred_fallthru
      _
    // Predicated region
    $region22: #{tpu_custom_call.1} parent=1 // pred_check
      _
    $region23: #{tpu_custom_call.1} parent=1 // pred_check_branch
      %57 = sbr.rel (0) target = $region25
    $region24: #{tpu_custom_call.1} parent=1 // pred_region
      %59 = dma.done [#allocation3], 4096
    $region25: #{tpu_custom_call.1} parent=1 // pred_fallthru
      _
    // Predicated region
    $region26: #{tpu_custom_call.1} parent=1 // pred_check
      _
    $region27: #{tpu_custom_call.1} parent=1 // pred_check_branch
      %61 = sbr.rel (0) target = $region29
    $region28: #{tpu_custom_call.1} parent=1 // pred_region
      %63 = dma.done [#allocation6], 1024
    $region29: #{tpu_custom_call.1} parent=1 // pred_fallthru
      _
    // Predicated region
    $region30: #{tpu_custom_call.1} parent=1 // pred_check
      _
    $region31: #{tpu_custom_call.1} parent=1 // pred_check_branch
      %65 = sbr.rel (0) target = $region33
    $region32: #{tpu_custom_call.1} parent=1 // pred_region
      %67 = dma.done [#allocation6], 2048
    $region33: #{tpu_custom_call.1} parent=1 // pred_fallthru
      _
    %v68 = vld [vmem:[#allocation2] sm:$0xff]
    %v69 = vld [vmem:[#allocation2 + $0x8] sm:$0xff]
    %v70 = vld [vmem:[#allocation2 + $0x10] sm:$0xff]
    %v71 = vld [vmem:[#allocation2 + $0x18] sm:$0xff]
    %v72 = vld [vmem:[#allocation2 + $0x20] sm:$0xff]
    %v73 = vld [vmem:[#allocation2 + $0x28] sm:$0xff]
    %v74 = vld [vmem:[#allocation2 + $0x30] sm:$0xff]
    %v75 = vld [vmem:[#allocation2 + $0x38] sm:$0xff]
    %v76 = vld [vmem:[#allocation2 + $0x40] sm:$0xff]
    %v77 = vld [vmem:[#allocation2 + $0x48] sm:$0xff]
    %v78 = vld [vmem:[#allocation2 + $0x50] sm:$0xff]
    %v79 = vld [vmem:[#allocation2 + $0x58] sm:$0xff]
    %v80 = vld [vmem:[#allocation2 + $0x60] sm:$0xff]
    %v81 = vld [vmem:[#allocation2 + $0x68] sm:$0xff]
    %v82 = vld [vmem:[#allocation2 + $0x70] sm:$0xff]
    %v83 = vld [vmem:[#allocation2 + $0x78] sm:$0xff]
    %v84 = vld [vmem:[#allocation2 + $0x80] sm:$0xff]
    %v85 = vld [vmem:[#allocation2 + $0x88] sm:$0xff]
    %v86 = vld [vmem:[#allocation2 + $0x90] sm:$0xff]
    %v87 = vld [vmem:[#allocation2 + $0x98] sm:$0xff]
    %v88 = vld [vmem:[#allocation2 + $0xa0] sm:$0xff]
    %v89 = vld [vmem:[#allocation2 + $0xa8] sm:$0xff]
    %v90 = vld [vmem:[#allocation2 + $0xb0] sm:$0xff]
    %v91 = vld [vmem:[#allocation2 + $0xb8] sm:$0xff]
    %v92 = vld [vmem:[#allocation2 + $0xc0] sm:$0xff]
    %v93 = vld [vmem:[#allocation2 + $0xc8] sm:$0xff]
    %v94 = vld [vmem:[#allocation2 + $0xd0] sm:$0xff]
    %v95 = vld [vmem:[#allocation2 + $0xd8] sm:$0xff]
    %v96 = vld [vmem:[#allocation2 + $0xe0] sm:$0xff]
    %v97 = vld [vmem:[#allocation2 + $0xe8] sm:$0xff]
    %v98 = vld [vmem:[#allocation2 + $0xf0] sm:$0xff]
    %v99 = vld [vmem:[#allocation2 + $0xf8] sm:$0xff]
    %v100 = vld [vmem:[#allocation5] sm:$0xf]
    %v101 = vld [vmem:[#allocation5 + $0x4] sm:$0xf]
    %v102 = vld [vmem:[#allocation5 + $0x8] sm:$0xf]
    %v103 = vld [vmem:[#allocation5 + $0xc] sm:$0xf]
    %v104 = vld [vmem:[#allocation5 + $0x10] sm:$0xf]
    %v105 = vld [vmem:[#allocation5 + $0x14] sm:$0xf]
    %v106 = vld [vmem:[#allocation5 + $0x18] sm:$0xf]
    %v107 = vld [vmem:[#allocation5 + $0x1c] sm:$0xf]
    %v108 = vld [vmem:[#allocation5 + $0x20] sm:$0xf]
    %v109 = vld [vmem:[#allocation5 + $0x24] sm:$0xf]
    %v110 = vld [vmem:[#allocation5 + $0x28] sm:$0xf]
    %v111 = vld [vmem:[#allocation5 + $0x2c] sm:$0xf]
    %v112 = vld [vmem:[#allocation5 + $0x30] sm:$0xf]
    %v113 = vld [vmem:[#allocation5 + $0x34] sm:$0xf]
    %v114 = vld [vmem:[#allocation5 + $0x38] sm:$0xf]
    %v115 = vld [vmem:[#allocation5 + $0x3c] sm:$0xf]
    %v116 = vpack.c.bf16 %v69, %v68
    %v117 = vpack.c.bf16 %v71, %v70
    %v118 = vpack.c.bf16 %v73, %v72
    %v119 = vpack.c.bf16 %v75, %v74
    %v120 = vpack.c.bf16 %v77, %v76
    %v121 = vpack.c.bf16 %v79, %v78
    %v122 = vpack.c.bf16 %v81, %v80
    %v123 = vpack.c.bf16 %v83, %v82
    %v124 = vpack.c.bf16 %v85, %v84
    %v125 = vpack.c.bf16 %v87, %v86
    %v126 = vpack.c.bf16 %v89, %v88
    %v127 = vpack.c.bf16 %v91, %v90
    %v128 = vpack.c.bf16 %v93, %v92
    %v129 = vpack.c.bf16 %v95, %v94
    %v130 = vpack.c.bf16 %v97, %v96
    %v131 = vpack.c.bf16 %v99, %v98
    %v132 = vld [vmem:[%s2] sm:$0x1]
    %v134 = vperm.slane %v132, 0
    %v152 = vunpack.c.l.b16 %v100
    %v153 = vunpack.c.l.b16 %v101
    %v154 = vunpack.c.l.b16 %v102
    %v155 = vunpack.c.l.b16 %v103
    %v156 = vunpack.c.l.b16 %v104
    %v157 = vunpack.c.l.b16 %v105
    %v158 = vunpack.c.l.b16 %v106
    %v159 = vunpack.c.l.b16 %v107
    %v160 = vunpack.c.l.b16 %v108
    %v161 = vunpack.c.l.b16 %v109
    %v162 = vunpack.c.l.b16 %v110
    %v163 = vunpack.c.l.b16 %v111
    %v164 = vunpack.c.l.b16 %v112
    %v165 = vunpack.c.l.b16 %v113
    %v166 = vunpack.c.l.b16 %v114
    %v167 = vunpack.c.l.b16 %v115
    %v168 = vpack.c.b16 %v153, %v152
    %v169 = vpack.c.b16 %v155, %v154
    %v170 = vpack.c.b16 %v157, %v156
    %v171 = vpack.c.b16 %v159, %v158
    %v172 = vpack.c.b16 %v161, %v160
    %v173 = vpack.c.b16 %v163, %v162
    %v174 = vpack.c.b16 %v165, %v164
    %v175 = vpack.c.b16 %v167, %v166
    %184 = vmatpush.bf16.msra.mxu0 %v175
    %185 = vmatpush.bf16.msra.mxu0 %v174
    %186 = vmatpush.bf16.msra.mxu0 %v173
    %187 = vmatpush.bf16.msra.mxu0 %v172
    %188 = vmatpush.bf16.msra.mxu0 %v171
    %189 = vmatpush.bf16.msra.mxu0 %v170
    %190 = vmatpush.bf16.msra.mxu0 %v169
    %191 = vmatpush.bf16.msra.mxu0 %v168
    %192 = vmatmul.bf16.gmra.mxu0 %v116
    %v193 = vpop.f32.mrf.mxu0
    %v194 = vadd.f32 %v134, %v193
    %v195 = vpop.f32.mrf.mxu0
    %v196 = vadd.f32 %v134, %v195
    %197 = vmatmul.bf16.gmra.mxu0 %v117
    %v198 = vpop.f32.mrf.mxu0
    %v199 = vadd.f32 %v134, %v198
    %v200 = vpop.f32.mrf.mxu0
    %v201 = vadd.f32 %v134, %v200
    %202 = vmatmul.bf16.gmra.mxu0 %v118
    %v203 = vpop.f32.mrf.mxu0
    %v204 = vadd.f32 %v134, %v203
    %v205 = vpop.f32.mrf.mxu0
    %v206 = vadd.f32 %v134, %v205
    %207 = vmatmul.bf16.gmra.mxu0 %v119
    %v208 = vpop.f32.mrf.mxu0
    %v209 = vadd.f32 %v134, %v208
    %v210 = vpop.f32.mrf.mxu0
    %v211 = vadd.f32 %v134, %v210
    %212 = vmatmul.bf16.gmra.mxu0 %v120
    %v213 = vpop.f32.mrf.mxu0
    %v214 = vadd.f32 %v134, %v213
    %v215 = vpop.f32.mrf.mxu0
    %v216 = vadd.f32 %v134, %v215
    %217 = vmatmul.bf16.gmra.mxu0 %v121
    %v218 = vpop.f32.mrf.mxu0
    %v219 = vadd.f32 %v134, %v218
    %v220 = vpop.f32.mrf.mxu0
    %v221 = vadd.f32 %v134, %v220
    %222 = vmatmul.bf16.gmra.mxu0 %v122
    %v223 = vpop.f32.mrf.mxu0
    %v224 = vadd.f32 %v134, %v223
    %v225 = vpop.f32.mrf.mxu0
    %v226 = vadd.f32 %v134, %v225
    %227 = vmatmul.bf16.gmra.mxu0 %v123
    %v228 = vpop.f32.mrf.mxu0
    %v229 = vadd.f32 %v134, %v228
    %v230 = vpop.f32.mrf.mxu0
    %v231 = vadd.f32 %v134, %v230
    %232 = vmatmul.bf16.gmra.mxu0 %v124
    %v233 = vpop.f32.mrf.mxu0
    %v234 = vadd.f32 %v134, %v233
    %v235 = vpop.f32.mrf.mxu0
    %v236 = vadd.f32 %v134, %v235
    %237 = vmatmul.bf16.gmra.mxu0 %v125
    %v238 = vpop.f32.mrf.mxu0
    %v239 = vadd.f32 %v134, %v238
    %v240 = vpop.f32.mrf.mxu0
    %v241 = vadd.f32 %v134, %v240
    %242 = vmatmul.bf16.gmra.mxu0 %v126
    %v243 = vpop.f32.mrf.mxu0
    %v244 = vadd.f32 %v134, %v243
    %v245 = vpop.f32.mrf.mxu0
    %v246 = vadd.f32 %v134, %v245
    %247 = vmatmul.bf16.gmra.mxu0 %v127
    %v248 = vpop.f32.mrf.mxu0
    %v249 = vadd.f32 %v134, %v248
    %v250 = vpop.f32.mrf.mxu0
    %v251 = vadd.f32 %v134, %v250
    %252 = vmatmul.bf16.gmra.mxu0 %v128
    %v253 = vpop.f32.mrf.mxu0
    %v254 = vadd.f32 %v134, %v253
    %v255 = vpop.f32.mrf.mxu0
    %v256 = vadd.f32 %v134, %v255
    %257 = vmatmul.bf16.gmra.mxu0 %v129
    %v258 = vpop.f32.mrf.mxu0
    %v259 = vadd.f32 %v134, %v258
    %v260 = vpop.f32.mrf.mxu0
    %v261 = vadd.f32 %v134, %v260
    %262 = vmatmul.bf16.gmra.mxu0 %v130
    %v263 = vpop.f32.mrf.mxu0
    %v264 = vadd.f32 %v134, %v263
    %v265 = vpop.f32.mrf.mxu0
    %v266 = vadd.f32 %v134, %v265
    %267 = vmatmul.bf16.gmra.mxu0 %v131
    %v268 = vpop.f32.mrf.mxu0
    %v269 = vadd.f32 %v134, %v268
    %v270 = vpop.f32.mrf.mxu0
    %v271 = vadd.f32 %v134, %v270
    %272 = vdwg.mxu0
    %v273 = vtanh.pop %v194
    %v274 = vtanh.pop %v196
    %v275 = vtanh.pop %v199
    %v276 = vtanh.pop %v201
    %v277 = vtanh.pop %v204
    %v278 = vtanh.pop %v206
    %v279 = vtanh.pop %v209
    %v280 = vtanh.pop %v211
    %v281 = vtanh.pop %v214
    %v282 = vtanh.pop %v216
    %v283 = vtanh.pop %v219
    %v284 = vtanh.pop %v221
    %v285 = vtanh.pop %v224
    %v286 = vtanh.pop %v226
    %v287 = vtanh.pop %v229
    %v288 = vtanh.pop %v231
    %v289 = vtanh.pop %v234
    %v290 = vtanh.pop %v236
    %v291 = vtanh.pop %v239
    %v292 = vtanh.pop %v241
    %v293 = vtanh.pop %v244
    %v294 = vtanh.pop %v246
    %v295 = vtanh.pop %v249
    %v296 = vtanh.pop %v251
    %v297 = vtanh.pop %v254
    %v298 = vtanh.pop %v256
    %v299 = vtanh.pop %v259
    %v300 = vtanh.pop %v261
    %v301 = vtanh.pop %v264
    %v302 = vtanh.pop %v266
    %v303 = vtanh.pop %v269
    %v304 = vtanh.pop %v271
    %v305 = vld [vmem:[#allocation7] sm:$0xf]
    %v306 = vld [vmem:[#allocation7 + $0x4] sm:$0xf]
    %v307 = vld [vmem:[#allocation7 + $0x8] sm:$0xf]
    %v308 = vld [vmem:[#allocation7 + $0xc] sm:$0xf]
    %v309 = vld [vmem:[#allocation7 + $0x10] sm:$0xf]
    %v310 = vld [vmem:[#allocation7 + $0x14] sm:$0xf]
    %v311 = vld [vmem:[#allocation7 + $0x18] sm:$0xf]
    %v312 = vld [vmem:[#allocation7 + $0x1c] sm:$0xf]
    %v313 = vld [vmem:[#allocation7 + $0x20] sm:$0xf]
    %v314 = vld [vmem:[#allocation7 + $0x24] sm:$0xf]
    %v315 = vld [vmem:[#allocation7 + $0x28] sm:$0xf]
    %v316 = vld [vmem:[#allocation7 + $0x2c] sm:$0xf]
    %v317 = vld [vmem:[#allocation7 + $0x30] sm:$0xf]
    %v318 = vld [vmem:[#allocation7 + $0x34] sm:$0xf]
    %v319 = vld [vmem:[#allocation7 + $0x38] sm:$0xf]
    %v320 = vld [vmem:[#allocation7 + $0x3c] sm:$0xf]
    %v321 = vpack.c.bf16 %v274, %v273
    %v322 = vpack.c.bf16 %v276, %v275
    %v323 = vpack.c.bf16 %v278, %v277
    %v324 = vpack.c.bf16 %v280, %v279
    %v325 = vpack.c.bf16 %v282, %v281
    %v326 = vpack.c.bf16 %v284, %v283
    %v327 = vpack.c.bf16 %v286, %v285
    %v328 = vpack.c.bf16 %v288, %v287
    %v329 = vpack.c.bf16 %v290, %v289
    %v330 = vpack.c.bf16 %v292, %v291
    %v331 = vpack.c.bf16 %v294, %v293
    %v332 = vpack.c.bf16 %v296, %v295
    %v333 = vpack.c.bf16 %v298, %v297
    %v334 = vpack.c.bf16 %v300, %v299
    %v335 = vpack.c.bf16 %v302, %v301
    %v336 = vpack.c.bf16 %v304, %v303
    %v337 = vld [vmem:[%s4] sm:$0x1]
    %v339 = vperm.slane %v337, 0
    %v357 = vunpack.c.l.b16 %v305
    %v358 = vunpack.c.l.b16 %v306
    %v359 = vunpack.c.l.b16 %v307
    %v360 = vunpack.c.l.b16 %v308
    %v361 = vunpack.c.l.b16 %v309
    %v362 = vunpack.c.l.b16 %v310
    %v363 = vunpack.c.l.b16 %v311
    %v364 = vunpack.c.l.b16 %v312
    %v365 = vunpack.c.l.b16 %v313
    %v366 = vunpack.c.l.b16 %v314
    %v367 = vunpack.c.l.b16 %v315
    %v368 = vunpack.c.l.b16 %v316
    %v369 = vunpack.c.l.b16 %v317
    %v370 = vunpack.c.l.b16 %v318
    %v371 = vunpack.c.l.b16 %v319
    %v372 = vunpack.c.l.b16 %v320
    %v373 = vpack.c.b16 %v358, %v357
    %v374 = vpack.c.b16 %v360, %v359
    %v375 = vpack.c.b16 %v362, %v361
    %v376 = vpack.c.b16 %v364, %v363
    %v377 = vpack.c.b16 %v366, %v365
    %v378 = vpack.c.b16 %v368, %v367
    %v379 = vpack.c.b16 %v370, %v369
    %v380 = vpack.c.b16 %v372, %v371
    %389 = vmatpush.bf16.msra.mxu0 %v380
    %390 = vmatpush.bf16.msra.mxu0 %v379
    %391 = vmatpush.bf16.msra.mxu0 %v378
    %392 = vmatpush.bf16.msra.mxu0 %v377
    %393 = vmatpush.bf16.msra.mxu0 %v376
    %394 = vmatpush.bf16.msra.mxu0 %v375
    %395 = vmatpush.bf16.msra.mxu0 %v374
    %396 = vmatpush.bf16.msra.mxu0 %v373
    %397 = vmatmul.bf16.gmra.mxu0 %v321
    %v398 = vpop.f32.mrf.mxu0
    %v399 = vadd.f32 %v339, %v398
    %v400 = vpop.f32.mrf.mxu0
    %v401 = vadd.f32 %v339, %v400
    %402 = vmatmul.bf16.gmra.mxu0 %v322
    %v403 = vpop.f32.mrf.mxu0
    %v404 = vadd.f32 %v339, %v403
    %v405 = vpop.f32.mrf.mxu0
    %v406 = vadd.f32 %v339, %v405
    %407 = vmatmul.bf16.gmra.mxu0 %v323
    %v408 = vpop.f32.mrf.mxu0
    %v409 = vadd.f32 %v339, %v408
    %v410 = vpop.f32.mrf.mxu0
    %v411 = vadd.f32 %v339, %v410
    %412 = vmatmul.bf16.gmra.mxu0 %v324
    %v413 = vpop.f32.mrf.mxu0
    %v414 = vadd.f32 %v339, %v413
    %v415 = vpop.f32.mrf.mxu0
    %v416 = vadd.f32 %v339, %v415
    %417 = vmatmul.bf16.gmra.mxu0 %v325
    %v418 = vpop.f32.mrf.mxu0
    %v419 = vadd.f32 %v339, %v418
    %v420 = vpop.f32.mrf.mxu0
    %v421 = vadd.f32 %v339, %v420
    %422 = vmatmul.bf16.gmra.mxu0 %v326
    %v423 = vpop.f32.mrf.mxu0
    %v424 = vadd.f32 %v339, %v423
    %v425 = vpop.f32.mrf.mxu0
    %v426 = vadd.f32 %v339, %v425
    %427 = vmatmul.bf16.gmra.mxu0 %v327
    %v428 = vpop.f32.mrf.mxu0
    %v429 = vadd.f32 %v339, %v428
    %v430 = vpop.f32.mrf.mxu0
    %v431 = vadd.f32 %v339, %v430
    %432 = vmatmul.bf16.gmra.mxu0 %v328
    %v433 = vpop.f32.mrf.mxu0
    %v434 = vadd.f32 %v339, %v433
    %v435 = vpop.f32.mrf.mxu0
    %v436 = vadd.f32 %v339, %v435
    %437 = vmatmul.bf16.gmra.mxu0 %v329
    %v438 = vpop.f32.mrf.mxu0
    %v439 = vadd.f32 %v339, %v438
    %v440 = vpop.f32.mrf.mxu0
    %v441 = vadd.f32 %v339, %v440
    %442 = vmatmul.bf16.gmra.mxu0 %v330
    %v443 = vpop.f32.mrf.mxu0
    %v444 = vadd.f32 %v339, %v443
    %v445 = vpop.f32.mrf.mxu0
    %v446 = vadd.f32 %v339, %v445
    %447 = vmatmul.bf16.gmra.mxu0 %v331
    %v448 = vpop.f32.mrf.mxu0
    %v449 = vadd.f32 %v339, %v448
    %v450 = vpop.f32.mrf.mxu0
    %v451 = vadd.f32 %v339, %v450
    %452 = vmatmul.bf16.gmra.mxu0 %v332
    %v453 = vpop.f32.mrf.mxu0
    %v454 = vadd.f32 %v339, %v453
    %v455 = vpop.f32.mrf.mxu0
    %v456 = vadd.f32 %v339, %v455
    %457 = vmatmul.bf16.gmra.mxu0 %v333
    %v458 = vpop.f32.mrf.mxu0
    %v459 = vadd.f32 %v339, %v458
    %v460 = vpop.f32.mrf.mxu0
    %v461 = vadd.f32 %v339, %v460
    %462 = vmatmul.bf16.gmra.mxu0 %v334
    %v463 = vpop.f32.mrf.mxu0
    %v464 = vadd.f32 %v339, %v463
    %v465 = vpop.f32.mrf.mxu0
    %v466 = vadd.f32 %v339, %v465
    %467 = vmatmul.bf16.gmra.mxu0 %v335
    %v468 = vpop.f32.mrf.mxu0
    %v469 = vadd.f32 %v339, %v468
    %v470 = vpop.f32.mrf.mxu0
    %v471 = vadd.f32 %v339, %v470
    %472 = vmatmul.bf16.gmra.mxu0 %v336
    %v473 = vpop.f32.mrf.mxu0
    %v474 = vadd.f32 %v339, %v473
    %v475 = vpop.f32.mrf.mxu0
    %v476 = vadd.f32 %v339, %v475
    %477 = vdwg.mxu0
    %v478 = vtanh.pop %v399
    %v479 = vtanh.pop %v401
    %v480 = vtanh.pop %v404
    %v481 = vtanh.pop %v406
    %v482 = vtanh.pop %v409
    %v483 = vtanh.pop %v411
    %v484 = vtanh.pop %v414
    %v485 = vtanh.pop %v416
    %v486 = vtanh.pop %v419
    %v487 = vtanh.pop %v421
    %v488 = vtanh.pop %v424
    %v489 = vtanh.pop %v426
    %v490 = vtanh.pop %v429
    %v491 = vtanh.pop %v431
    %v492 = vtanh.pop %v434
    %v493 = vtanh.pop %v436
    %v494 = vtanh.pop %v439
    %v495 = vtanh.pop %v441
    %v496 = vtanh.pop %v444
    %v497 = vtanh.pop %v446
    %v498 = vtanh.pop %v449
    %v499 = vtanh.pop %v451
    %v500 = vtanh.pop %v454
    %v501 = vtanh.pop %v456
    %v502 = vtanh.pop %v459
    %v503 = vtanh.pop %v461
    %v504 = vtanh.pop %v464
    %v505 = vtanh.pop %v466
    %v506 = vtanh.pop %v469
    %v507 = vtanh.pop %v471
    %v508 = vtanh.pop %v474
    %v509 = vtanh.pop %v476
    %s510 = scalar_lea.vmem [#allocation7], 64
    %v511 = vld [vmem:[%s510] sm:$0xf]
    %v512 = vld [vmem:[%s510 + $0x4] sm:$0xf]
    %v513 = vld [vmem:[%s510 + $0x8] sm:$0xf]
    %v514 = vld [vmem:[%s510 + $0xc] sm:$0xf]
    %v515 = vld [vmem:[%s510 + $0x10] sm:$0xf]
    %v516 = vld [vmem:[%s510 + $0x14] sm:$0xf]
    %v517 = vld [vmem:[%s510 + $0x18] sm:$0xf]
    %v518 = vld [vmem:[%s510 + $0x1c] sm:$0xf]
    %v519 = vld [vmem:[%s510 + $0x20] sm:$0xf]
    %v520 = vld [vmem:[%s510 + $0x24] sm:$0xf]
    %v521 = vld [vmem:[%s510 + $0x28] sm:$0xf]
    %v522 = vld [vmem:[%s510 + $0x2c] sm:$0xf]
    %v523 = vld [vmem:[%s510 + $0x30] sm:$0xf]
    %v524 = vld [vmem:[%s510 + $0x34] sm:$0xf]
    %v525 = vld [vmem:[%s510 + $0x38] sm:$0xf]
    %v526 = vld [vmem:[%s510 + $0x3c] sm:$0xf]
    %v527 = vpack.c.bf16 %v479, %v478
    %v528 = vpack.c.bf16 %v481, %v480
    %v529 = vpack.c.bf16 %v483, %v482
    %v530 = vpack.c.bf16 %v485, %v484
    %v531 = vpack.c.bf16 %v487, %v486
    %v532 = vpack.c.bf16 %v489, %v488
    %v533 = vpack.c.bf16 %v491, %v490
    %v534 = vpack.c.bf16 %v493, %v492
    %v535 = vpack.c.bf16 %v495, %v494
    %v536 = vpack.c.bf16 %v497, %v496
    %v537 = vpack.c.bf16 %v499, %v498
    %v538 = vpack.c.bf16 %v501, %v500
    %v539 = vpack.c.bf16 %v503, %v502
    %v540 = vpack.c.bf16 %v505, %v504
    %v541 = vpack.c.bf16 %v507, %v506
    %v542 = vpack.c.bf16 %v509, %v508
    %s543 = scalar_lea.vmem %s4, 1
    %v544 = vld [vmem:[%s543] sm:$0x1]
    %v546 = vperm.slane %v544, 0
    %v564 = vunpack.c.l.b16 %v511
    %v565 = vunpack.c.l.b16 %v512
    %v566 = vunpack.c.l.b16 %v513
    %v567 = vunpack.c.l.b16 %v514
    %v568 = vunpack.c.l.b16 %v515
    %v569 = vunpack.c.l.b16 %v516
    %v570 = vunpack.c.l.b16 %v517
    %v571 = vunpack.c.l.b16 %v518
    %v572 = vunpack.c.l.b16 %v519
    %v573 = vunpack.c.l.b16 %v520
    %v574 = vunpack.c.l.b16 %v521
    %v575 = vunpack.c.l.b16 %v522
    %v576 = vunpack.c.l.b16 %v523
    %v577 = vunpack.c.l.b16 %v524
    %v578 = vunpack.c.l.b16 %v525
    %v579 = vunpack.c.l.b16 %v526
    %v580 = vpack.c.b16 %v565, %v564
    %v581 = vpack.c.b16 %v567, %v566
    %v582 = vpack.c.b16 %v569, %v568
    %v583 = vpack.c.b16 %v571, %v570
    %v584 = vpack.c.b16 %v573, %v572
    %v585 = vpack.c.b16 %v575, %v574
    %v586 = vpack.c.b16 %v577, %v576
    %v587 = vpack.c.b16 %v579, %v578
    %596 = vmatpush.bf16.msra.mxu0 %v587
    %597 = vmatpush.bf16.msra.mxu0 %v586
    %598 = vmatpush.bf16.msra.mxu0 %v585
    %599 = vmatpush.bf16.msra.mxu0 %v584
    %600 = vmatpush.bf16.msra.mxu0 %v583
    %601 = vmatpush.bf16.msra.mxu0 %v582
    %602 = vmatpush.bf16.msra.mxu0 %v581
    %603 = vmatpush.bf16.msra.mxu0 %v580
    %604 = vmatmul.bf16.gmra.mxu0 %v527
    %v605 = vpop.f32.mrf.mxu0
    %v606 = vadd.f32 %v546, %v605
    %v607 = vpop.f32.mrf.mxu0
    %v608 = vadd.f32 %v546, %v607
    %609 = vmatmul.bf16.gmra.mxu0 %v528
    %v610 = vpop.f32.mrf.mxu0
    %v611 = vadd.f32 %v546, %v610
    %v612 = vpop.f32.mrf.mxu0
    %v613 = vadd.f32 %v546, %v612
    %614 = vmatmul.bf16.gmra.mxu0 %v529
    %v615 = vpop.f32.mrf.mxu0
    %v616 = vadd.f32 %v546, %v615
    %v617 = vpop.f32.mrf.mxu0
    %v618 = vadd.f32 %v546, %v617
    %619 = vmatmul.bf16.gmra.mxu0 %v530
    %v620 = vpop.f32.mrf.mxu0
    %v621 = vadd.f32 %v546, %v620
    %v622 = vpop.f32.mrf.mxu0
    %v623 = vadd.f32 %v546, %v622
    %624 = vmatmul.bf16.gmra.mxu0 %v531
    %v625 = vpop.f32.mrf.mxu0
    %v626 = vadd.f32 %v546, %v625
    %v627 = vpop.f32.mrf.mxu0
    %v628 = vadd.f32 %v546, %v627
    %629 = vmatmul.bf16.gmra.mxu0 %v532
    %v630 = vpop.f32.mrf.mxu0
    %v631 = vadd.f32 %v546, %v630
    %v632 = vpop.f32.mrf.mxu0
    %v633 = vadd.f32 %v546, %v632
    %634 = vmatmul.bf16.gmra.mxu0 %v533
    %v635 = vpop.f32.mrf.mxu0
    %v636 = vadd.f32 %v546, %v635
    %v637 = vpop.f32.mrf.mxu0
    %v638 = vadd.f32 %v546, %v637
    %639 = vmatmul.bf16.gmra.mxu0 %v534
    %v640 = vpop.f32.mrf.mxu0
    %v641 = vadd.f32 %v546, %v640
    %v642 = vpop.f32.mrf.mxu0
    %v643 = vadd.f32 %v546, %v642
    %644 = vmatmul.bf16.gmra.mxu0 %v535
    %v645 = vpop.f32.mrf.mxu0
    %v646 = vadd.f32 %v546, %v645
    %v647 = vpop.f32.mrf.mxu0
    %v648 = vadd.f32 %v546, %v647
    %649 = vmatmul.bf16.gmra.mxu0 %v536
    %v650 = vpop.f32.mrf.mxu0
    %v651 = vadd.f32 %v546, %v650
    %v652 = vpop.f32.mrf.mxu0
    %v653 = vadd.f32 %v546, %v652
    %654 = vmatmul.bf16.gmra.mxu0 %v537
    %v655 = vpop.f32.mrf.mxu0
    %v656 = vadd.f32 %v546, %v655
    %v657 = vpop.f32.mrf.mxu0
    %v658 = vadd.f32 %v546, %v657
    %659 = vmatmul.bf16.gmra.mxu0 %v538
    %v660 = vpop.f32.mrf.mxu0
    %v661 = vadd.f32 %v546, %v660
    %v662 = vpop.f32.mrf.mxu0
    %v663 = vadd.f32 %v546, %v662
    %664 = vmatmul.bf16.gmra.mxu0 %v539
    %v665 = vpop.f32.mrf.mxu0
    %v666 = vadd.f32 %v546, %v665
    %v667 = vpop.f32.mrf.mxu0
    %v668 = vadd.f32 %v546, %v667
    %669 = vmatmul.bf16.gmra.mxu0 %v540
    %v670 = vpop.f32.mrf.mxu0
    %v671 = vadd.f32 %v546, %v670
    %v672 = vpop.f32.mrf.mxu0
    %v673 = vadd.f32 %v546, %v672
    %674 = vmatmul.bf16.gmra.mxu0 %v541
    %v675 = vpop.f32.mrf.mxu0
    %v676 = vadd.f32 %v546, %v675
    %v677 = vpop.f32.mrf.mxu0
    %v678 = vadd.f32 %v546, %v677
    %679 = vmatmul.bf16.gmra.mxu0 %v542
    %v680 = vpop.f32.mrf.mxu0
    %v681 = vadd.f32 %v546, %v680
    %v682 = vpop.f32.mrf.mxu0
    %v683 = vadd.f32 %v546, %v682
    %684 = vdwg.mxu0
    %v685 = vtanh.pop %v606
    %v686 = vtanh.pop %v608
    %v687 = vtanh.pop %v611
    %v688 = vtanh.pop %v613
    %v689 = vtanh.pop %v616
    %v690 = vtanh.pop %v618
    %v691 = vtanh.pop %v621
    %v692 = vtanh.pop %v623
    %v693 = vtanh.pop %v626
    %v694 = vtanh.pop %v628
    %v695 = vtanh.pop %v631
    %v696 = vtanh.pop %v633
    %v697 = vtanh.pop %v636
    %v698 = vtanh.pop %v638
    %v699 = vtanh.pop %v641
    %v700 = vtanh.pop %v643
    %v701 = vtanh.pop %v646
    %v702 = vtanh.pop %v648
    %v703 = vtanh.pop %v651
    %v704 = vtanh.pop %v653
    %v705 = vtanh.pop %v656
    %v706 = vtanh.pop %v658
    %v707 = vtanh.pop %v661
    %v708 = vtanh.pop %v663
    %v709 = vtanh.pop %v666
    %v710 = vtanh.pop %v668
    %v711 = vtanh.pop %v671
    %v712 = vtanh.pop %v673
    %v713 = vtanh.pop %v676
    %v714 = vtanh.pop %v678
    %v715 = vtanh.pop %v681
    %v716 = vtanh.pop %v683
    %717 = vst [vmem:[#allocation8] sm:$0xff] %v685
    %718 = vst [vmem:[#allocation8 + $0x8] sm:$0xff] %v686
    %719 = vst [vmem:[#allocation8 + $0x10] sm:$0xff] %v687
    %720 = vst [vmem:[#allocation8 + $0x18] sm:$0xff] %v688
    %721 = vst [vmem:[#allocation8 + $0x20] sm:$0xff] %v689
    %722 = vst [vmem:[#allocation8 + $0x28] sm:$0xff] %v690
    %723 = vst [vmem:[#allocation8 + $0x30] sm:$0xff] %v691
    %724 = vst [vmem:[#allocation8 + $0x38] sm:$0xff] %v692
    %725 = vst [vmem:[#allocation8 + $0x40] sm:$0xff] %v693
    %726 = vst [vmem:[#allocation8 + $0x48] sm:$0xff] %v694
    %727 = vst [vmem:[#allocation8 + $0x50] sm:$0xff] %v695
    %728 = vst [vmem:[#allocation8 + $0x58] sm:$0xff] %v696
    %729 = vst [vmem:[#allocation8 + $0x60] sm:$0xff] %v697
    %730 = vst [vmem:[#allocation8 + $0x68] sm:$0xff] %v698
    %731 = vst [vmem:[#allocation8 + $0x70] sm:$0xff] %v699
    %732 = vst [vmem:[#allocation8 + $0x78] sm:$0xff] %v700
    %733 = vst [vmem:[#allocation8 + $0x80] sm:$0xff] %v701
    %734 = vst [vmem:[#allocation8 + $0x88] sm:$0xff] %v702
    %735 = vst [vmem:[#allocation8 + $0x90] sm:$0xff] %v703
    %736 = vst [vmem:[#allocation8 + $0x98] sm:$0xff] %v704
    %737 = vst [vmem:[#allocation8 + $0xa0] sm:$0xff] %v705
    %738 = vst [vmem:[#allocation8 + $0xa8] sm:$0xff] %v706
    %739 = vst [vmem:[#allocation8 + $0xb0] sm:$0xff] %v707
    %740 = vst [vmem:[#allocation8 + $0xb8] sm:$0xff] %v708
    %741 = vst [vmem:[#allocation8 + $0xc0] sm:$0xff] %v709
    %742 = vst [vmem:[#allocation8 + $0xc8] sm:$0xff] %v710
    %743 = vst [vmem:[#allocation8 + $0xd0] sm:$0xff] %v711
    %744 = vst [vmem:[#allocation8 + $0xd8] sm:$0xff] %v712
    %745 = vst [vmem:[#allocation8 + $0xe0] sm:$0xff] %v713
    %746 = vst [vmem:[#allocation8 + $0xe8] sm:$0xff] %v714
    %747 = vst [vmem:[#allocation8 + $0xf0] sm:$0xff] %v715
    %748 = vst [vmem:[#allocation8 + $0xf8] sm:$0xff] %v716
    // Predicated region
    $region34: #{tpu_custom_call.1} parent=1 // pred_check
      _
    $region35: #{tpu_custom_call.1} parent=1 // pred_check_branch
      %750 = sbr.rel (0) target = $region37
    $region36: #{tpu_custom_call.1} parent=1 // pred_region
      %752 = vsyncadd [#allocation4], 0
      %s753 = sshll.u32 [#allocation8], 4
      %s754 = int_to_ptr.vmem [resolvable:$true] %s753
      %s755 = sshll.u32 %s5, 4
      %s756 = int_to_ptr.hbm [resolvable:$true] %s755
      %761 = dma.vmem_to_hbm [thread:$0]  %s754, 4096, %s756, [#allocation4], 128, 128, 8
    $region37: #{tpu_custom_call.1} parent=1 // pred_fallthru
      _
    // Predicated region
    $region38: #{tpu_custom_call.1} parent=1 // pred_check
      _
    $region39: #{tpu_custom_call.1} parent=1 // pred_check_branch
      %763 = sbr.rel (0) target = $region41
    $region40: #{tpu_custom_call.1} parent=1 // pred_region
      %765 = dma.done [#allocation4], 4096
    $region41: #{tpu_custom_call.1} parent=1 // pred_fallthru
      _
    %766 = vsyncpa [#allocation3], 1
    %767 = vsyncpa [#allocation6], 1
    %768 = vsyncpa [#allocation4], 1

</llo_original>
